<compile_context>
chip_gen: v7x
topology: tpu7x:2x2x1
jax: 0.10.0
libtpu: 0.0.40
codegen_flags: <defaults>
</compile_context>

<pallas_src>
import jax
import jax.numpy as jnp
from jax.experimental import pallas as pl
from jax.experimental.pallas import tpu as pltpu


def _interp_weight_matrix(out_size: int, in_size: int) -> jnp.ndarray:
    """align_corners=True 1-D linear interpolation weights: (out_size, in_size)."""
    d = jnp.arange(out_size, dtype=jnp.float32)
    if out_size > 1:
        src = d * (in_size - 1) / (out_size - 1)
    else:
        src = jnp.zeros((out_size,), dtype=jnp.float32)
    i0 = jnp.clip(jnp.floor(src).astype(jnp.int32), 0, in_size - 1)
    i1 = jnp.clip(i0 + 1, 0, in_size - 1)
    w1 = src - i0.astype(jnp.float32)
    w0 = 1.0 - w1
    cols = jnp.arange(in_size, dtype=jnp.int32)[None, :]
    m0 = (cols == i0[:, None]).astype(jnp.float32) * w0[:, None]
    m1 = (cols == i1[:, None]).astype(jnp.float32) * w1[:, None]
    return m0 + m1


def _resize_kernel(wwt_ref, wh_ref, x_ref, o_ref):
    # x block: (B_blk, H_in, W_in); weight blocks are resident (same block every step).
    b_blk, h_in, w_in = x_ref.shape
    wwt = wwt_ref[...]                                   # (W_in, W_out), pre-scaled by factor
    wh = wh_ref[...]                                     # (H_out, H_in)

    # --- W-axis interpolation: one big MXU matmul, M = B_blk * H_in rows ---
    x2d = x_ref[...].reshape(b_blk * h_in, w_in)         # leading-dim merge: free
    t = jnp.dot(x2d, wwt, preferred_element_type=jnp.float32)   # (B_blk*H_in, W_out)
    t = t.reshape(b_blk, h_in, -1).astype(wh.dtype)      # leading-dim split: free

    # --- H-axis interpolation: batched contraction over h (flash-attn pattern) ---
    wh_b = jnp.broadcast_to(wh, (b_blk,) + wh.shape)     # (B_blk, H_out, H_in)
    y = jnp.einsum('boh,bhw->bow', wh_b, t,
                   preferred_element_type=jnp.float32)   # (B_blk, H_out, W_out)

    o_ref[...] = y.astype(o_ref.dtype)


def resize_transform(x: jnp.ndarray, vel_resize: float) -> jnp.ndarray:
    """JAX/Pallas equivalent of ResizeTransform.forward for 2-D (NCHW) input."""
    # TODO(synk): only the ndims=2 ('bilinear') path is implemented; trilinear
    # (ndims=3) would need a third separable contraction.
    factor = 1.0 / float(vel_resize)
    if factor == 1.0:
        return x

    n, c, h_in, w_in = x.shape
    # PyTorch: output spatial size = floor(input_size * scale_factor)
    h_out = int(h_in * factor)
    w_out = int(w_in * factor)

    # Keep bf16/f16 inputs low-precision on the MXU; otherwise compute in f32.
    compute_dtype = (x.dtype if x.dtype in (jnp.dtype('bfloat16'), jnp.dtype('float16'))
                     else jnp.float32)

    wh = _interp_weight_matrix(h_out, h_in).astype(compute_dtype)                # (H_out, H_in)
    # Pre-transpose and fold the scalar `factor` into the W-axis weights.
    wwt = (_interp_weight_matrix(w_out, w_in).T * factor).astype(compute_dtype)  # (W_in, W_out)

    nc = n * c
    x_flat = x.reshape(nc, h_in, w_in)

    # --- block-size selection vs. VMEM budget ---
    itemsize = x.dtype.itemsize
    cdt_size = jnp.dtype(compute_dtype).itemsize
    per_slice_bytes = (
        2 * h_in * w_in * itemsize        # double-buffered input block
        + 2 * h_out * w_out * itemsize    # double-buffered output block
        + h_in * w_out * 4                # f32 intermediate t
        + h_in * w_out * cdt_size         # t cast for second matmul
        + h_out * w_out * 4               # f32 intermediate y
        + h_out * h_in * cdt_size         # broadcast copy of Wh
    )
    vmem_budget = 8 * 1024 * 1024                        # conservative; fits every chip's default
    b_blk = int(max(1, min(nc, vmem_budget // max(per_slice_bytes, 1))))
    b_blk = min(b_blk, 512)
    # Keep >=2 grid steps when possible so both v7x TensorCores get work.
    if b_blk >= nc and nc > 1:
        b_blk = (nc + 1) // 2
    nc_pad = -(-nc // b_blk) * b_blk
    if nc_pad != nc:
        x_flat = jnp.pad(x_flat, ((0, nc_pad - nc), (0, 0), (0, 0)))

    grid = (nc_pad // b_blk,)

    out_flat = pl.pallas_call(
        _resize_kernel,
        out_shape=jax.ShapeDtypeStruct((nc_pad, h_out, w_out), x.dtype),
        grid_spec=pltpu.PrefetchScalarGridSpec(
            num_scalar_prefetch=0,
            grid=grid,
            in_specs=[
                pl.BlockSpec((w_in, w_out), lambda i: (0, 0)),        # WwT (pre-scaled, shared)
                pl.BlockSpec((h_out, h_in), lambda i: (0, 0)),        # Wh (shared)
                pl.BlockSpec((b_blk, h_in, w_in), lambda i: (i, 0, 0)),
            ],
            out_specs=pl.BlockSpec((b_blk, h_out, w_out), lambda i: (i, 0, 0)),
        ),
        compiler_params=pltpu.CompilerParams(
            dimension_semantics=("parallel",),
            vmem_limit_bytes=32 * 1024 * 1024),
    )(wwt, wh, x_flat)

    return out_flat[:nc].reshape(n, c, h_out, w_out)


def _reference(x, vel_resize):
    """Pure-JAX reference (same separable formulation) for a sanity check."""
    factor = 1.0 / float(vel_resize)
    if factor == 1.0:
        return x
    n, c, h_in, w_in = x.shape
    h_out, w_out = int(h_in * factor), int(w_in * factor)
    wh = _interp_weight_matrix(h_out, h_in)
    ww = _interp_weight_matrix(w_out, w_in)
    y = jnp.einsum('oh,nchw,pw->ncop', wh, x.astype(jnp.float32), ww)
    return (factor * y).astype(x.dtype)


if __name__ == "__main__":
    key = jax.random.PRNGKey(0)
    # ResizeTransform(vel_resize=0.5, ndims=2) -> factor = 2.0 (upsample flow field)
    vel_resize = 0.5
    n, c, h, w = 2, 2, 16, 16          # flow field: C = ndims = 2
    x = jax.random.normal(key, (n, c, h, w), dtype=jnp.float32)

    y = jax.block_until_ready(resize_transform(x, vel_resize))
    y_ref = _reference(x, vel_resize)

    assert y.shape == (n, c, 32, 32), y.shape
    assert jnp.allclose(y, y_ref, atol=1e-5, rtol=1e-5), float(jnp.max(jnp.abs(y - y_ref)))

    print("KERNEL_OK")
</pallas_src>

<mosaic_0001>
module attributes {stable_mosaic.version = 11 : i64} {
  func.func @_resize_kernel(%arg0: i32, %arg1: memref<16x32xf32, #tpu.memory_space<vmem>>, %arg2: memref<32x16xf32, #tpu.memory_space<vmem>>, %arg3: memref<2x16x16xf32, #tpu.memory_space<vmem>>, %arg4: memref<2x32x32xf32, #tpu.memory_space<vmem>>) attributes {dimension_semantics = [#tpu.dimension_semantics<parallel>], iteration_bounds = array<i64: 2>, scalar_prefetch = 0 : i64, scratch_operands = 0 : i64, tpu.core_type = #tpu.core_type<tc>, window_params = [{pipeline_mode = #tpu.pipeline_mode<synchronous>, transform_indices = @transform_0, window_bounds = array<i64: 16, 32>}, {pipeline_mode = #tpu.pipeline_mode<synchronous>, transform_indices = @transform_1, window_bounds = array<i64: 32, 16>}, {transform_indices = @transform_2, window_bounds = array<i64: 2, 16, 16>}, {transform_indices = @transform_3, window_bounds = array<i64: 2, 32, 32>}]} {
    %c0 = arith.constant 0 : index
    %c0_0 = arith.constant 0 : index
    %0 = vector.load %arg1[%c0, %c0_0] : memref<16x32xf32, #tpu.memory_space<vmem>>, vector<16x32xf32>
    %c0_1 = arith.constant 0 : index
    %c0_2 = arith.constant 0 : index
    %1 = vector.load %arg2[%c0_1, %c0_2] : memref<32x16xf32, #tpu.memory_space<vmem>>, vector<32x16xf32>
    %c0_3 = arith.constant 0 : index
    %c0_4 = arith.constant 0 : index
    %c0_5 = arith.constant 0 : index
    %2 = vector.load %arg3[%c0_3, %c0_4, %c0_5] : memref<2x16x16xf32, #tpu.memory_space<vmem>>, vector<2x16x16xf32>
    %3 = vector.shape_cast %2 : vector<2x16x16xf32> to vector<32x16xf32>
    %cst = arith.constant dense<0.000000e+00> : vector<32x32xf32>
    %4 = tpu.matmul %3, %0, %cst {dimension_numbers = #tpu.dot_dimension_numbers<[1], [0], [0], [1], [0, 0, 1, 1], [], []>} : vector<32x16xf32>, vector<16x32xf32>, vector<32x32xf32> -> vector<32x32xf32>
    %5 = vector.shape_cast %4 : vector<32x32xf32> to vector<2x16x32xf32>
    %6 = vector.shape_cast %1 : vector<32x16xf32> to vector<1x32x16xf32>
    %7 = vector.broadcast %6 : vector<1x32x16xf32> to vector<2x32x16xf32>
    "tpu.trace_start"() <{level = 10 : i32, message = "boh,bhw->bow"}> : () -> ()
    %cst_6 = arith.constant dense<0.000000e+00> : vector<2x32x32xf32>
    %8 = tpu.matmul %7, %5, %cst_6 {dimension_numbers = #tpu.dot_dimension_numbers<[2], [1], [1], [2], [0, 0, 0, 1, 1, 2], [0], [0]>} : vector<2x32x16xf32>, vector<2x16x32xf32>, vector<2x32x32xf32> -> vector<2x32x32xf32>
    "tpu.trace_stop"() : () -> ()
    %c0_7 = arith.constant 0 : index
    %c0_8 = arith.constant 0 : index
    %c0_9 = arith.constant 0 : index
    %9 = vector.load %arg4[%c0_7, %c0_8, %c0_9] : memref<2x32x32xf32, #tpu.memory_space<vmem>>, vector<2x32x32xf32>
    tpu.vector_store %arg4[%c0_7, %c0_8, %c0_9], %8 {strides = array<i32>} : memref<2x32x32xf32, #tpu.memory_space<vmem>>, vector<2x32x32xf32>,
    return
  }
  func.func @transform_0(%arg0: i32) -> (i32, i32) {
    %c0_i32 = arith.constant 0 : i32
    %c0_i32_0 = arith.constant 0 : i32
    %c0_i32_1 = arith.constant 0 : i32
    return %c0_i32, %c0_i32_0 : i32, i32
  }
  func.func @transform_1(%arg0: i32) -> (i32, i32) {
    %c0_i32 = arith.constant 0 : i32
    %c0_i32_0 = arith.constant 0 : i32
    %c0_i32_1 = arith.constant 0 : i32
    return %c0_i32, %c0_i32_0 : i32, i32
  }
  func.func @transform_2(%arg0: i32) -> (i32, i32, i32) {
    %c0_i32 = arith.constant 0 : i32
    %c0_i32_0 = arith.constant 0 : i32
    %c0_i32_1 = arith.constant 0 : i32
    return %arg0, %c0_i32, %c0_i32_0 : i32, i32, i32
  }
  func.func @transform_3(%arg0: i32) -> (i32, i32, i32) {
    %c0_i32 = arith.constant 0 : i32
    %c0_i32_0 = arith.constant 0 : i32
    %c0_i32_1 = arith.constant 0 : i32
    return %arg0, %c0_i32, %c0_i32_0 : i32, i32, i32
  }
}

</mosaic_0001>

<llo_original>
// kernel: tpu_custom_call.1
$region0: #{tpu_custom_call.1}
  #allocation0 [shape = 'u32[]', space=smem, size = 0x4, offset = 0x4, fixed_abs, tag = 'smem constant byte address 0x4 - core index']
  #allocation1 [shape = 'u32[144,128]{1,0:T(1,128)}', space=vmem, size = 0x12000, scoped, tag = 'internal scratch']
  %s0 = inlined_call_operand.vmem [shape: f32[16,32], index: 0, kind: input, shape index: {}]
  %s1 = inlined_call_operand.vmem [shape: f32[32,16], index: 1, kind: input, shape index: {}]
  %s2 = inlined_call_operand.hbm [shape: f32[4,16,16], index: 2, kind: input, shape index: {}]
  %s3 = inlined_call_operand.hbm [shape: f32[4,32,32], index: 3, kind: output, shape index: {}]
  %s4 = sld [smem:[#allocation0]]
  $region49: #{tpu_custom_call.1} parent=0
    _
  %s6 = ssub.s32 1, %s4
  %s7 = scalar_select 0, %s6, %s4
  $region1: #{tpu_custom_call.1} parent=0
    #allocation2 [shape = 'u8[32768]{0}', space=vmem, size = 0x8000, scoped, tag = 'input window, operand 2']
    #allocation3 [shape = 's32[2]{0}', space=sflag, size = 0x8, scoped, tag = 'scoped memory for tpu_custom_call.1']
    #allocation4 [shape = 's32[2]{0}', space=sflag, size = 0x8, scoped, tag = 'scoped memory for tpu_custom_call.1']
    #allocation5 [shape = 'u8[65536]{0}', space=vmem, size = 0x10000, scoped, tag = 'output window, operand 0']
    %8 = vsyncpa [#allocation3], 0
    %s9 = scalar_lea.sflag [#allocation3], 1
    %10 = vsyncpa %s9, 0
    %11 = vsyncpa [#allocation4], 0
    %s12 = scalar_lea.sflag [#allocation4], 1
    %13 = vsyncpa %s12, 0
    loop: start=0, step=1, limit=4
    $region2: #{tpu_custom_call.1} parent=1 // loop_pre_header
      _
    $region3: #{tpu_custom_call.1} parent=1 // loop_header
      %s15 = sphi 0, %s19
      %p16 = scmp.ge.s32.totalorder %s15, 4
      %s23 = sphi 0, %s23
      %s25 = sphi 0, %s23
      %s26 = sphi 0, %s25
      %s40 = sphi 0, %s26
      %s44 = sphi 0, %s44
      %s46 = sphi 0, %s44
      %s47 = sphi 0, %s46
      %s61 = sphi 0, %s47
      %s67 = sphi 0, %s69
      %s70 = sphi 0, %s67
      %s71 = sphi 0, %s70
      %s87 = sphi 0, %s71
      %s93 = sphi 0, %s95
      %s96 = sphi 0, %s93
      %s97 = sphi 0, %s96
      %s113 = sphi 0, %s97
    $region4: #{tpu_custom_call.1} parent=1 // loop_header_branch
      %18 = sbr.rel (%p16) target = $region8
    $region5: #{tpu_custom_call.1} parent=1 // loop_body
      %s20 = ssub.s32 %s15, 1
      %s21 = ssub.s32 %s15, 2
      %s22 = sadd.s32 %s15, 1
      %s24 = sadd.s32 %s23, 1
      %p27 = scmp.eq.s32.totalorder %s15, 1
      %p28 = scmp.ne.s32.totalorder %s23, %s25
      %p29 = scmp.eq.s32.totalorder %s15, 0
      %p30 = por %p28, %p29
      %p31 = scmp.ne.s32.totalorder %s23, %s25
      %p32 = scmp.eq.s32.totalorder %s20, 1
      %p33 = por %p31, %p32
      %p34 = scmp.ne.s32.totalorder %s25, %s26
      %p35 = scmp.eq.s32.totalorder %s20, 0
      %p36 = por %p34, %p35
      %p37 = scmp.ne.s32.totalorder %s25, %s26
      %p38 = scmp.eq.s32.totalorder %s21, 1
      %p39 = por %p37, %p38
      %p41 = scmp.ne.s32.totalorder %s26, %s40
      %p42 = scmp.eq.s32.totalorder %s21, 0
      %p43 = por %p41, %p42
      %s45 = sadd.s32 %s44, 1
      %p48 = scmp.eq.s32.totalorder %s15, 1
      %p49 = scmp.ne.s32.totalorder %s44, %s46
      %p50 = scmp.eq.s32.totalorder %s15, 0
      %p51 = por %p49, %p50
      %p52 = scmp.ne.s32.totalorder %s44, %s46
      %p53 = scmp.eq.s32.totalorder %s20, 1
      %p54 = por %p52, %p53
      %p55 = scmp.ne.s32.totalorder %s46, %s47
      %p56 = scmp.eq.s32.totalorder %s20, 0
      %p57 = por %p55, %p56
      %p58 = scmp.ne.s32.totalorder %s46, %s47
      %p59 = scmp.eq.s32.totalorder %s21, 1
      %p60 = por %p58, %p59
      %p62 = scmp.ne.s32.totalorder %s47, %s61
      %p63 = scmp.eq.s32.totalorder %s21, 0
      %p64 = por %p62, %p63
      %s65 = ssub.s32 %s15, %s22
      %p66 = scmp.eq.s32.totalorder %s65, 0
      %s68 = sadd.s32 %s67, 1
      %s69 = scalar_select %p66, %s67, %s68
      %p72 = pneg %p66
      %p73 = scmp.eq.s32.totalorder %s15, 1
      %p74 = por %p72, %p73
      %p75 = scmp.ne.s32.totalorder %s67, %s70
      %p76 = scmp.eq.s32.totalorder %s15, 0
      %p77 = por %p75, %p76
      %p78 = scmp.ne.s32.totalorder %s67, %s70
      %p79 = scmp.eq.s32.totalorder %s20, 1
      %p80 = por %p78, %p79
      %p81 = scmp.ne.s32.totalorder %s70, %s71
      %p82 = scmp.eq.s32.totalorder %s20, 0
      %p83 = por %p81, %p82
      %p84 = scmp.ne.s32.totalorder %s70, %s71
      %p85 = scmp.eq.s32.totalorder %s21, 1
      %p86 = por %p84, %p85
      %p88 = scmp.ne.s32.totalorder %s71, %s87
      %p89 = scmp.eq.s32.totalorder %s21, 0
      %p90 = por %p88, %p89
      %s91 = ssub.s32 %s15, %s22
      %p92 = scmp.eq.s32.totalorder %s91, 0
      %s94 = sadd.s32 %s93, 1
      %s95 = scalar_select %p92, %s93, %s94
      %p98 = pneg %p92
      %p99 = scmp.eq.s32.totalorder %s15, 1
      %p100 = por %p98, %p99
      %p101 = scmp.ne.s32.totalorder %s93, %s96
      %p102 = scmp.eq.s32.totalorder %s15, 0
      %p103 = por %p101, %p102
      %p104 = scmp.ne.s32.totalorder %s93, %s96
      %p105 = scmp.eq.s32.totalorder %s20, 1
      %p106 = por %p104, %p105
      %p107 = scmp.ne.s32.totalorder %s96, %s97
      %p108 = scmp.eq.s32.totalorder %s20, 0
      %p109 = por %p107, %p108
      %p110 = scmp.ne.s32.totalorder %s96, %s97
      %p111 = scmp.eq.s32.totalorder %s21, 1
      %p112 = por %p110, %p111
      %p114 = scmp.ne.s32.totalorder %s97, %s113
      %p115 = scmp.eq.s32.totalorder %s21, 0
      %p116 = por %p114, %p115
      %p117 = scmp.le.s32.totalorder 1, %s15
      %p118 = scmp.lt.s32.totalorder %s15, 3
      %p119 = pnand %p117, %p118
      %p120 = pneg %p119
      // Predicated region
      $region9: #{tpu_custom_call.1} parent=5 // pred_check
        _
      $region10: #{tpu_custom_call.1} parent=5 // pred_check_branch
        %122 = sbr.rel (%p119) target = $region12
      $region11: #{tpu_custom_call.1} parent=5 // pred_region
        %s123 = ssub.s32 %s15, 1
        // Predicated region
        $region13: #{tpu_custom_call.1} parent=11 // pred_check
          %p124 = pneg %p36
        $region14: #{tpu_custom_call.1} parent=11 // pred_check_branch
          %126 = sbr.rel (%p124) target = $region16
        $region15: #{tpu_custom_call.1} parent=11 // pred_region
          _
        $region16: #{tpu_custom_call.1} parent=11 // pred_fallthru
          _
        // Predicated region
        $region17: #{tpu_custom_call.1} parent=11 // pred_check
          %p127 = pneg %p57
        $region18: #{tpu_custom_call.1} parent=11 // pred_check_branch
          %129 = sbr.rel (%p127) target = $region20
        $region19: #{tpu_custom_call.1} parent=11 // pred_region
          _
        $region20: #{tpu_custom_call.1} parent=11 // pred_fallthru
          _
      $region12: #{tpu_custom_call.1} parent=5 // pred_fallthru
        _
      %p130 = scmp.lt.s32.totalorder %s15, 2
      // Predicated region
      $region21: #{tpu_custom_call.1} parent=5 // pred_check
        %p131 = pneg %p130
      $region22: #{tpu_custom_call.1} parent=5 // pred_check_branch
        %133 = sbr.rel (%p131) target = $region24
      $region23: #{tpu_custom_call.1} parent=5 // pred_region
        // Predicated region
        $region25: #{tpu_custom_call.1} parent=23 // pred_check
          %p134 = pneg %p77
        $region26: #{tpu_custom_call.1} parent=23 // pred_check_branch
          %136 = sbr.rel (%p134) target = $region28
        $region27: #{tpu_custom_call.1} parent=23 // pred_region
          %s137 = sand.u32 %s67, 1
          %s138 = scalar_lea.sflag [#allocation3], %s137
          %s139 = sand.u32 %s67, 1
          %s140 = smul.addr %s139, 32
          %s141 = scalar_lea.vmem [#allocation2], %s140
          %s142 = smul.u32 2, %s15
          %s144 = ssub.s32 512, 512
          %145 = vsyncadd %s138, %s144
          %s146 = smul.addr %s142, 2
          %s147 = smul.addr %s146, 128
          %s148 = scalar_lea.hbm %s2, %s147
          %s149 = sshll.u32 %s141, 4
          %s150 = int_to_ptr.vmem [resolvable:$true] %s149
          %155 = dma.hbm_to_vmem [thread:$0]  %s148, 512, %s150, %s138, 128, 128, 8
        $region28: #{tpu_custom_call.1} parent=23 // pred_fallthru
          _
      $region24: #{tpu_custom_call.1} parent=5 // pred_fallthru
        _
      %p156 = scmp.le.s32.totalorder 1, %s15
      %p157 = scmp.lt.s32.totalorder %s15, 3
      %p158 = pnand %p156, %p157
      %p159 = pneg %p158
      // Predicated region
      $region29: #{tpu_custom_call.1} parent=5 // pred_check
        _
      $region30: #{tpu_custom_call.1} parent=5 // pred_check_branch
        %161 = sbr.rel (%p158) target = $region32
      $region31: #{tpu_custom_call.1} parent=5 // pred_region
        %s162 = ssub.s32 %s15, 1
        %s163 = sand.u32 %s70, 1
        %s164 = scalar_lea.sflag [#allocation3], %s163
        %s165 = sand.u32 %s70, 1
        %s166 = smul.addr %s165, 32
        %s167 = scalar_lea.vmem [#allocation2], %s166
        // Predicated region
        $region33: #{tpu_custom_call.1} parent=31 // pred_check
          %p168 = pneg %p83
        $region34: #{tpu_custom_call.1} parent=31 // pred_check_branch
          %170 = sbr.rel (%p168) target = $region36
        $region35: #{tpu_custom_call.1} parent=31 // pred_region
          %171 = dma.done %s164, 512
        $region36: #{tpu_custom_call.1} parent=31 // pred_fallthru
          _
        %p172 = pneg %p36
        %p173 = pneg %p33
        %p174 = pneg %p57
        %p175 = pneg %p54
        %s176 = sand.u32 %s70, 1
        %s177 = scalar_lea.sflag [#allocation3], %s176
        %s178 = sand.u32 %s70, 1
        %s179 = smul.addr %s178, 32
        %s180 = scalar_lea.vmem [#allocation2], %s179
        %p181 = pneg %p83
        %p182 = pneg %p80
        %p183 = pneg %p109
        %p184 = pneg %p106
        %s185 = sand.u32 %s96, 1
        %s186 = scalar_lea.sflag [#allocation4], %s185
        %s187 = sand.u32 %s96, 1
        %s188 = smul.addr %s187, 64
        %s189 = scalar_lea.vmem [#allocation5], %s188
        %s190 = smul.u32 2, %s20
        %s191 = smul.u32 2, %s20
        %v192 = vld [vmem:[%s0] sm:$0xff]
        %v193 = vld [vmem:[%s0 + $0x8] sm:$0xff]
        %v194 = vld [vmem:[%s1] sm:$0xff]
        %v195 = vld [vmem:[%s1 + $0x8] sm:$0xff]
        %v196 = vld [vmem:[%s1 + $0x10] sm:$0xff]
        %v197 = vld [vmem:[%s1 + $0x18] sm:$0xff]
        %v198 = vld [vmem:[%s167] sm:$0xff]
        %v199 = vld [vmem:[%s167 + $0x8] sm:$0xff]
        %v200 = vld [vmem:[%s167 + $0x10] sm:$0xff]
        %v201 = vld [vmem:[%s167 + $0x18] sm:$0xff]
        %vm202 = vcmask 130048
        %v204 = vsel %vm202, %v198, 0
        %v207 = vsel %vm202, %v199, 0
        %v210 = vsel %vm202, %v200, 0
        %v213 = vsel %vm202, %v201, 0
        %215 = vmatprep.subr.mxu0 0.0
        %216 = vmatpush1.msra.mxu0 %v192
        %217 = vmatprep.subr.mxu0 0.0
        %218 = vmatpush1.msra.mxu0 %v193
        %219 = vmatprep.subr.mxu0 0.0
        %220 = vmatpush1.msra.mxu0 0.0
        %221 = vmatprep.subr.mxu0 0.0
        %222 = vmatpush1.msra.mxu0 0.0
        %223 = vmatprep.subr.mxu0 0.0
        %224 = vmatpush1.msra.mxu0 0.0
        %225 = vmatprep.subr.mxu0 0.0
        %226 = vmatpush1.msra.mxu0 0.0
        %227 = vmatprep.subr.mxu0 0.0
        %228 = vmatpush1.msra.mxu0 0.0
        %229 = vmatprep.subr.mxu0 0.0
        %230 = vmatpush1.msra.mxu0 0.0
        %231 = vmatprep.subr.mxu0 0.0
        %232 = vmatpush1.msra.mxu0 0.0
        %233 = vmatprep.subr.mxu0 0.0
        %234 = vmatpush1.msra.mxu0 0.0
        %235 = vmatprep.subr.mxu0 0.0
        %236 = vmatpush1.msra.mxu0 0.0
        %237 = vmatprep.subr.mxu0 0.0
        %238 = vmatpush1.msra.mxu0 0.0
        %239 = vmatprep.subr.mxu0 0.0
        %240 = vmatpush1.msra.mxu0 0.0
        %241 = vmatprep.subr.mxu0 0.0
        %242 = vmatpush1.msra.mxu0 0.0
        %243 = vmatprep.subr.mxu0 0.0
        %244 = vmatpush1.msra.mxu0 0.0
        %245 = vmatprep.subr.mxu0 0.0
        %246 = vmatpush1.msra.mxu0 0.0
        %247 = vmatprep.subr.mxu0 0.0
        %248 = vmatpush1.msra.mxu0 0.0
        %249 = vmatprep.subr.mxu0 0.0
        %250 = vmatpush1.msra.mxu0 0.0
        %251 = vmatprep.subr.mxu0 0.0
        %252 = vmatpush1.msra.mxu0 0.0
        %253 = vmatprep.subr.mxu0 0.0
        %254 = vmatpush1.msra.mxu0 0.0
        %255 = vmatprep.subr.mxu0 0.0
        %256 = vmatpush1.msra.mxu0 0.0
        %257 = vmatprep.subr.mxu0 0.0
        %258 = vmatpush1.msra.mxu0 0.0
        %259 = vmatprep.subr.mxu0 0.0
        %260 = vmatpush1.msra.mxu0 0.0
        %261 = vmatprep.subr.mxu0 0.0
        %262 = vmatpush1.msra.mxu0 0.0
        %263 = vmatprep.subr.mxu0 0.0
        %264 = vmatpush1.msra.mxu0 0.0
        %265 = vmatprep.subr.mxu0 0.0
        %266 = vmatpush1.msra.mxu0 0.0
        %267 = vmatprep.subr.mxu0 0.0
        %268 = vmatpush1.msra.mxu0 0.0
        %269 = vmatprep.subr.mxu0 0.0
        %270 = vmatpush1.msra.mxu0 0.0
        %271 = vmatprep.subr.mxu0 0.0
        %272 = vmatpush1.msra.mxu0 0.0
        %273 = vmatprep.subr.mxu0 0.0
        %274 = vmatpush1.msra.mxu0 0.0
        %275 = vmatprep.subr.mxu0 0.0
        %276 = vmatpush1.msra.mxu0 0.0
        %277 = vmatprep.subr.mxu0 0.0
        %278 = vmatpush1.msra.mxu0 0.0
        %279 = vmatprep.mubr.f32.mxu0 0.0
        %280 = vmatmul.mubr.f32.gmra.mrb[0].mxu0 %v204
        %v281 = vpop.f32.mrb[0].mxu0
        %v282 = vadd.f32 0.0, %v281
        %v283 = vpop.f32.mrb[0].mxu0
        %284 = vmatprep.mubr.f32.mxu0 0.0
        %285 = vmatmul.mubr.f32.gmra.mrb[0].mxu0 %v207
        %v286 = vpop.f32.mrb[0].mxu0
        %v287 = vadd.f32 0.0, %v286
        %v288 = vpop.f32.mrb[0].mxu0
        %289 = vmatprep.mubr.f32.mxu0 0.0
        %290 = vmatmul.mubr.f32.gmra.mrb[0].mxu0 %v210
        %v291 = vpop.f32.mrb[0].mxu0
        %v292 = vadd.f32 0.0, %v291
        %v293 = vpop.f32.mrb[0].mxu0
        %294 = vmatprep.mubr.f32.mxu0 0.0
        %295 = vmatmul.mubr.f32.gmra.mrb[0].mxu0 %v213
        %v296 = vpop.f32.mrb[0].mxu0
        %v297 = vadd.f32 0.0, %v296
        %v298 = vpop.f32.mrb[0].mxu0
        %299 = vdwg.mxu0
        %v301 = vsel %vm202, %v194, 0
        %v304 = vsel %vm202, %v195, 0
        %v307 = vsel %vm202, %v196, 0
        %v310 = vsel %vm202, %v197, 0
        %312 = vmatprep.subr.mxu0 0.0
        %313 = vmatpush1.msra.mxu0 %v282
        %314 = vmatprep.subr.mxu0 0.0
        %315 = vmatpush1.msra.mxu0 %v287
        %316 = vmatprep.subr.mxu0 0.0
        %317 = vmatpush1.msra.mxu0 0.0
        %318 = vmatprep.subr.mxu0 0.0
        %319 = vmatpush1.msra.mxu0 0.0
        %320 = vmatprep.subr.mxu0 0.0
        %321 = vmatpush1.msra.mxu0 0.0
        %322 = vmatprep.subr.mxu0 0.0
        %323 = vmatpush1.msra.mxu0 0.0
        %324 = vmatprep.subr.mxu0 0.0
        %325 = vmatpush1.msra.mxu0 0.0
        %326 = vmatprep.subr.mxu0 0.0
        %327 = vmatpush1.msra.mxu0 0.0
        %328 = vmatprep.subr.mxu0 0.0
        %329 = vmatpush1.msra.mxu0 0.0
        %330 = vmatprep.subr.mxu0 0.0
        %331 = vmatpush1.msra.mxu0 0.0
        %332 = vmatprep.subr.mxu0 0.0
        %333 = vmatpush1.msra.mxu0 0.0
        %334 = vmatprep.subr.mxu0 0.0
        %335 = vmatpush1.msra.mxu0 0.0
        %336 = vmatprep.subr.mxu0 0.0
        %337 = vmatpush1.msra.mxu0 0.0
        %338 = vmatprep.subr.mxu0 0.0
        %339 = vmatpush1.msra.mxu0 0.0
        %340 = vmatprep.subr.mxu0 0.0
        %341 = vmatpush1.msra.mxu0 0.0
        %342 = vmatprep.subr.mxu0 0.0
        %343 = vmatpush1.msra.mxu0 0.0
        %344 = vmatprep.subr.mxu0 0.0
        %345 = vmatpush1.msra.mxu0 0.0
        %346 = vmatprep.subr.mxu0 0.0
        %347 = vmatpush1.msra.mxu0 0.0
        %348 = vmatprep.subr.mxu0 0.0
        %349 = vmatpush1.msra.mxu0 0.0
        %350 = vmatprep.subr.mxu0 0.0
        %351 = vmatpush1.msra.mxu0 0.0
        %352 = vmatprep.subr.mxu0 0.0
        %353 = vmatpush1.msra.mxu0 0.0
        %354 = vmatprep.subr.mxu0 0.0
        %355 = vmatpush1.msra.mxu0 0.0
        %356 = vmatprep.subr.mxu0 0.0
        %357 = vmatpush1.msra.mxu0 0.0
        %358 = vmatprep.subr.mxu0 0.0
        %359 = vmatpush1.msra.mxu0 0.0
        %360 = vmatprep.subr.mxu0 0.0
        %361 = vmatpush1.msra.mxu0 0.0
        %362 = vmatprep.subr.mxu0 0.0
        %363 = vmatpush1.msra.mxu0 0.0
        %364 = vmatprep.subr.mxu0 0.0
        %365 = vmatpush1.msra.mxu0 0.0
        %366 = vmatprep.subr.mxu0 0.0
        %367 = vmatpush1.msra.mxu0 0.0
        %368 = vmatprep.subr.mxu0 0.0
        %369 = vmatpush1.msra.mxu0 0.0
        %370 = vmatprep.subr.mxu0 0.0
        %371 = vmatpush1.msra.mxu0 0.0
        %372 = vmatprep.subr.mxu0 0.0
        %373 = vmatpush1.msra.mxu0 0.0
        %374 = vmatprep.subr.mxu0 0.0
        %375 = vmatpush1.msra.mxu0 0.0
        %376 = vmatprep.mubr.f32.mxu0 0.0
        %377 = vmatmul.mubr.f32.gmra.mrb[0].mxu0 %v301
        %v378 = vpop.f32.mrb[0].mxu0
        %v379 = vadd.f32 0.0, %v378
        %v380 = vpop.f32.mrb[0].mxu0
        %381 = vmatprep.mubr.f32.mxu0 0.0
        %382 = vmatmul.mubr.f32.gmra.mrb[0].mxu0 %v304
        %v383 = vpop.f32.mrb[0].mxu0
        %v384 = vadd.f32 0.0, %v383
        %v385 = vpop.f32.mrb[0].mxu0
        %386 = vmatprep.mubr.f32.mxu0 0.0
        %387 = vmatmul.mubr.f32.gmra.mrb[0].mxu0 %v307
        %v388 = vpop.f32.mrb[0].mxu0
        %v389 = vadd.f32 0.0, %v388
        %v390 = vpop.f32.mrb[0].mxu0
        %391 = vmatprep.mubr.f32.mxu0 0.0
        %392 = vmatmul.mubr.f32.gmra.mrb[0].mxu0 %v310
        %v393 = vpop.f32.mrb[0].mxu0
        %v394 = vadd.f32 0.0, %v393
        %v395 = vpop.f32.mrb[0].mxu0
        %396 = vdwg.mxu0
        %397 = vmatprep.subr.mxu0 0.0
        %398 = vmatpush1.msra.mxu0 %v292
        %399 = vmatprep.subr.mxu0 0.0
        %400 = vmatpush1.msra.mxu0 %v297
        %401 = vmatprep.subr.mxu0 0.0
        %402 = vmatpush1.msra.mxu0 0.0
        %403 = vmatprep.subr.mxu0 0.0
        %404 = vmatpush1.msra.mxu0 0.0
        %405 = vmatprep.subr.mxu0 0.0
        %406 = vmatpush1.msra.mxu0 0.0
        %407 = vmatprep.subr.mxu0 0.0
        %408 = vmatpush1.msra.mxu0 0.0
        %409 = vmatprep.subr.mxu0 0.0
        %410 = vmatpush1.msra.mxu0 0.0
        %411 = vmatprep.subr.mxu0 0.0
        %412 = vmatpush1.msra.mxu0 0.0
        %413 = vmatprep.subr.mxu0 0.0
        %414 = vmatpush1.msra.mxu0 0.0
        %415 = vmatprep.subr.mxu0 0.0
        %416 = vmatpush1.msra.mxu0 0.0
        %417 = vmatprep.subr.mxu0 0.0
        %418 = vmatpush1.msra.mxu0 0.0
        %419 = vmatprep.subr.mxu0 0.0
        %420 = vmatpush1.msra.mxu0 0.0
        %421 = vmatprep.subr.mxu0 0.0
        %422 = vmatpush1.msra.mxu0 0.0
        %423 = vmatprep.subr.mxu0 0.0
        %424 = vmatpush1.msra.mxu0 0.0
        %425 = vmatprep.subr.mxu0 0.0
        %426 = vmatpush1.msra.mxu0 0.0
        %427 = vmatprep.subr.mxu0 0.0
        %428 = vmatpush1.msra.mxu0 0.0
        %429 = vmatprep.subr.mxu0 0.0
        %430 = vmatpush1.msra.mxu0 0.0
        %431 = vmatprep.subr.mxu0 0.0
        %432 = vmatpush1.msra.mxu0 0.0
        %433 = vmatprep.subr.mxu0 0.0
        %434 = vmatpush1.msra.mxu0 0.0
        %435 = vmatprep.subr.mxu0 0.0
        %436 = vmatpush1.msra.mxu0 0.0
        %437 = vmatprep.subr.mxu0 0.0
        %438 = vmatpush1.msra.mxu0 0.0
        %439 = vmatprep.subr.mxu0 0.0
        %440 = vmatpush1.msra.mxu0 0.0
        %441 = vmatprep.subr.mxu0 0.0
        %442 = vmatpush1.msra.mxu0 0.0
        %443 = vmatprep.subr.mxu0 0.0
        %444 = vmatpush1.msra.mxu0 0.0
        %445 = vmatprep.subr.mxu0 0.0
        %446 = vmatpush1.msra.mxu0 0.0
        %447 = vmatprep.subr.mxu0 0.0
        %448 = vmatpush1.msra.mxu0 0.0
        %449 = vmatprep.subr.mxu0 0.0
        %450 = vmatpush1.msra.mxu0 0.0
        %451 = vmatprep.subr.mxu0 0.0
        %452 = vmatpush1.msra.mxu0 0.0
        %453 = vmatprep.subr.mxu0 0.0
        %454 = vmatpush1.msra.mxu0 0.0
        %455 = vmatprep.subr.mxu0 0.0
        %456 = vmatpush1.msra.mxu0 0.0
        %457 = vmatprep.subr.mxu0 0.0
        %458 = vmatpush1.msra.mxu0 0.0
        %459 = vmatprep.subr.mxu0 0.0
        %460 = vmatpush1.msra.mxu0 0.0
        %461 = vmatprep.mubr.f32.mxu0 0.0
        %462 = vmatmul.mubr.f32.gmra.mrb[0].mxu0 %v301
        %v463 = vpop.f32.mrb[0].mxu0
        %v464 = vadd.f32 0.0, %v463
        %v465 = vpop.f32.mrb[0].mxu0
        %466 = vmatprep.mubr.f32.mxu0 0.0
        %467 = vmatmul.mubr.f32.gmra.mrb[0].mxu0 %v304
        %v468 = vpop.f32.mrb[0].mxu0
        %v469 = vadd.f32 0.0, %v468
        %v470 = vpop.f32.mrb[0].mxu0
        %471 = vmatprep.mubr.f32.mxu0 0.0
        %472 = vmatmul.mubr.f32.gmra.mrb[0].mxu0 %v307
        %v473 = vpop.f32.mrb[0].mxu0
        %v474 = vadd.f32 0.0, %v473
        %v475 = vpop.f32.mrb[0].mxu0
        %476 = vmatprep.mubr.f32.mxu0 0.0
        %477 = vmatmul.mubr.f32.gmra.mrb[0].mxu0 %v310
        %v478 = vpop.f32.mrb[0].mxu0
        %v479 = vadd.f32 0.0, %v478
        %v480 = vpop.f32.mrb[0].mxu0
        %481 = vdwg.mxu0
        %vm482 = vcmask 261120
        %483 = vst.msk [vmem:[%s189] sm:$0xff] %vm482, %v379
        %484 = vst.msk [vmem:[%s189 + $0x8] sm:$0xff] %vm482, %v384
        %485 = vst.msk [vmem:[%s189 + $0x10] sm:$0xff] %vm482, %v389
        %486 = vst.msk [vmem:[%s189 + $0x18] sm:$0xff] %vm482, %v394
        %487 = vst.msk [vmem:[%s189 + $0x20] sm:$0xff] %vm482, %v464
        %488 = vst.msk [vmem:[%s189 + $0x28] sm:$0xff] %vm482, %v469
        %489 = vst.msk [vmem:[%s189 + $0x30] sm:$0xff] %vm482, %v474
        %490 = vst.msk [vmem:[%s189 + $0x38] sm:$0xff] %vm482, %v479
        %s491 = sand.u32 %s96, 1
        %s492 = scalar_lea.sflag [#allocation4], %s491
        %s493 = sand.u32 %s96, 1
        %s494 = smul.addr %s493, 64
        %s495 = scalar_lea.vmem [#allocation5], %s494
        // Predicated region
        $region37: #{tpu_custom_call.1} parent=31 // pred_check
          %p496 = pneg %p106
        $region38: #{tpu_custom_call.1} parent=31 // pred_check_branch
          %498 = sbr.rel (%p496) target = $region40
        $region39: #{tpu_custom_call.1} parent=31 // pred_region
          %s499 = smul.u32 2, %s20
          %s501 = ssub.s32 1024, 1024
          %502 = vsyncadd %s492, %s501
          %s503 = smul.addr %s499, 4
          %s504 = smul.addr %s503, 128
          %s505 = scalar_lea.hbm %s3, %s504
          %s506 = sshll.u32 %s495, 4
          %s507 = int_to_ptr.vmem [resolvable:$true] %s506
          %512 = dma.vmem_to_hbm [thread:$0]  %s507, 1024, %s505, %s492, 128, 128, 8
        $region40: #{tpu_custom_call.1} parent=31 // pred_fallthru
          _
      $region32: #{tpu_custom_call.1} parent=5 // pred_fallthru
        _
      %p513 = scmp.le.s32.totalorder 2, %s15
      // Predicated region
      $region41: #{tpu_custom_call.1} parent=5 // pred_check
        %p514 = pneg %p513
      $region42: #{tpu_custom_call.1} parent=5 // pred_check_branch
        %516 = sbr.rel (%p514) target = $region44
      $region43: #{tpu_custom_call.1} parent=5 // pred_region
        %s517 = ssub.s32 %s15, 2
        // Predicated region
        $region45: #{tpu_custom_call.1} parent=43 // pred_check
          %p518 = pneg %p112
        $region46: #{tpu_custom_call.1} parent=43 // pred_check_branch
          %520 = sbr.rel (%p518) target = $region48
        $region47: #{tpu_custom_call.1} parent=43 // pred_region
          %s521 = sand.u32 %s97, 1
          %s522 = scalar_lea.sflag [#allocation4], %s521
          %s523 = sand.u32 %s97, 1
          %s524 = smul.addr %s523, 64
          %s525 = scalar_lea.vmem [#allocation5], %s524
          %526 = dma.done %s522, 1024
        $region48: #{tpu_custom_call.1} parent=43 // pred_fallthru
          _
      $region44: #{tpu_custom_call.1} parent=5 // pred_fallthru
        _
    $region6: #{tpu_custom_call.1} parent=1 // loop_footer
      %s19 = sadd.s32 1, %s15
    $region7: #{tpu_custom_call.1} parent=1 // loop_footer_branch
      %14 = sbr.rel target = $region3
    $region8: #{tpu_custom_call.1} parent=1 // loop_exit
      _
    %527 = vsyncpa [#allocation3], 1
    %s528 = scalar_lea.sflag [#allocation3], 1
    %529 = vsyncpa %s528, 1
    %530 = vsyncpa [#allocation4], 1
    %s531 = scalar_lea.sflag [#allocation4], 1
    %532 = vsyncpa %s531, 1

</llo_original>
